<compile_context>
chip_gen: v7x
topology: tpu7x:2x2x1
jax: 0.10.0
libtpu: 0.0.40
codegen_flags: <defaults>
</compile_context>

<pallas_src>
import numpy as np

import jax
import jax.numpy as jnp
from jax.experimental import pallas as pl
from jax.experimental.pallas import tpu as pltpu


# ---------------------------------------------------------------------------
# Pallas kernel: one grid step == one tile of TB rows through the fused MLP.
# ---------------------------------------------------------------------------
def emb_preproc_kernel(x_ref, w1_ref, b1_ref, w2_ref, b2_ref, o_ref):
    # fc1: (TB, E)bf16 @ (E, H)bf16 -> f32 acc, + (1, H)f32 bias
    x = x_ref[...].astype(jnp.bfloat16)
    h = jnp.dot(x, w1_ref[...], preferred_element_type=jnp.float32) + b1_ref[...]
    # SiLU: exp and reciprocal both land on the EUP slot.
    h = h * pl.reciprocal(1.0 + jnp.exp(-h), approx=True)
    # fc2: (TB, H)bf16 @ (H, E)bf16 -> f32 acc, + (1, E)f32 bias.
    # E is a multiple of 128 -> lane-dense store.
    o_ref[...] = (jnp.dot(h.astype(jnp.bfloat16), w2_ref[...],
                          preferred_element_type=jnp.float32)
                  + b2_ref[...]).astype(o_ref.dtype)


# ---------------------------------------------------------------------------
# One-time parameter prep (hoisted out of the per-call path).
# ---------------------------------------------------------------------------
def prepare_params(params):
    """Pre-transpose weights to (in, out) in bf16; biases as f32 (1, out) rows."""
    return {
        "W1T": jnp.asarray(params["W1"]).T.astype(jnp.bfloat16),   # (E, H)
        "b1":  jnp.asarray(params["b1"])[None, :].astype(jnp.float32),
        "W2T": jnp.asarray(params["W2"]).T.astype(jnp.bfloat16),   # (H, E)
        "b2":  jnp.asarray(params["b2"])[None, :].astype(jnp.float32),
    }


def _round_up(v, m):
    return ((v + m - 1) // m) * m


# ---------------------------------------------------------------------------
# Wrapper
# ---------------------------------------------------------------------------
def embedding_preprocessor_forward(embedding, prepped, *, max_row_tile=512):
    """embedding: (..., embedding_dim).  Returns (..., embedding_dim), same dtype.

    Mirrors EmbeddingPreprocessor(multi_speaker=False).forward.
    """
    # TODO(synk): multi_speaker=True branch (MaxPool1d over the hidden dim) is not
    # implemented; the default (multi_speaker=False) path is what this covers.
    orig_shape = embedding.shape
    E = orig_shape[-1]
    H = prepped["W1T"].shape[1]

    x = embedding.reshape(-1, E)           # keep caller dtype (no f32 copy)
    N = x.shape[0]
    if N == 0:                             # empty-batch guard
        return x.reshape(orig_shape)

    # Row-tile selection:
    #  * N <= 256: one tile covering everything (block row dim == full array dim,
    #    so no (8,128) rounding is required and no padding happens at all).
    #  * otherwise: aim for >= 2 tiles (v7x has 2 TensorCores sharing the
    #    "parallel" row axis), multiples of 256 once big enough, cap at max_row_tile.
    if N <= 256:
        TB = N
    else:
        half = pl.cdiv(N, 2)
        TB = _round_up(half, 256) if half >= 256 else _round_up(half, 8)
        TB = min(TB, max_row_tile)
    n_tiles = pl.cdiv(N, TB)               # ragged last tile handled by Pallas

    out = pl.pallas_call(
        emb_preproc_kernel,
        out_shape=jax.ShapeDtypeStruct((N, E), x.dtype),
        grid_spec=pltpu.PrefetchScalarGridSpec(
            num_scalar_prefetch=0,
            grid=(n_tiles,),
            in_specs=[
                pl.BlockSpec((TB, E), lambda i: (i, 0)),   # activations: tiled rows
                pl.BlockSpec((E, H), lambda i: (0, 0)),    # fc1 weight (resident, bf16)
                pl.BlockSpec((1, H), lambda i: (0, 0)),    # fc1 bias (f32)
                pl.BlockSpec((H, E), lambda i: (0, 0)),    # fc2 weight (resident, bf16)
                pl.BlockSpec((1, E), lambda i: (0, 0)),    # fc2 bias (f32)
            ],
            out_specs=pl.BlockSpec((TB, E), lambda i: (i, 0)),
        ),
        compiler_params=pltpu.CompilerParams(
            dimension_semantics=("parallel",),             # row tiles independent
        ),
    )(x, prepped["W1T"], prepped["b1"], prepped["W2T"], prepped["b2"])

    return out.reshape(orig_shape[:-1] + (E,))


# ---------------------------------------------------------------------------
# Pure-JAX reference (mirrors the PyTorch forward, multi_speaker=False)
# ---------------------------------------------------------------------------
def ref_forward(embedding, p):
    h = embedding @ p["W1"].T + p["b1"]
    h = h * jax.nn.sigmoid(h)              # SiLU
    return h @ p["W2"].T + p["b2"]


def make_params(key, embedding_dim, hidden_dim):
    k1, k2, k3, k4 = jax.random.split(key, 4)
    n = lambda k, s: jax.random.normal(k, s, dtype=jnp.float32) * 0.05
    return {
        "W1": n(k1, (hidden_dim, embedding_dim)),   # fc1: Linear(E, H)
        "b1": n(k2, (hidden_dim,)),
        "W2": n(k3, (embedding_dim, hidden_dim)),   # fc2: Linear(H, E)
        "b2": n(k4, (embedding_dim,)),
    }


if __name__ == "__main__":
    EMBEDDING_DIM = 256   # module defaults (lane-aligned)
    HIDDEN_DIM = 512

    key = jax.random.PRNGKey(0)
    kx1, kx2, kp = jax.random.split(key, 3)
    params = make_params(kp, EMBEDDING_DIM, HIDDEN_DIM)
    prepped = prepare_params(params)       # one-time weight transpose + bf16 cast

    # Case 1: tiny batch (matches the module's typical (B, E) usage).
    emb_small = jax.random.normal(kx1, (2, EMBEDDING_DIM), dtype=jnp.float32)
    out_small = jax.block_until_ready(
        embedding_preprocessor_forward(emb_small, prepped))
    ref_small = jax.block_until_ready(ref_forward(emb_small, params))
    np.testing.assert_allclose(np.asarray(out_small), np.asarray(ref_small),
                               rtol=2e-2, atol=2e-2)

    # Case 2: larger, multi-dim leading shape -> exercises multi-tile + ragged edge.
    emb_big = jax.random.normal(kx2, (3, 100, EMBEDDING_DIM), dtype=jnp.float32)
    out_big = jax.block_until_ready(
        embedding_preprocessor_forward(emb_big, prepped))
    ref_big = jax.block_until_ready(ref_forward(emb_big, params))
    np.testing.assert_allclose(np.asarray(out_big), np.asarray(ref_big),
                               rtol=2e-2, atol=2e-2)

    print("KERNEL_OK")
</pallas_src>

<mosaic_0001>
module attributes {stable_mosaic.version = 11 : i64} {
  func.func @emb_preproc_kernel(%arg0: i32, %arg1: memref<2x256xf32, #tpu.memory_space<vmem>>, %arg2: memref<256x512xbf16, #tpu.memory_space<vmem>>, %arg3: memref<1x512xf32, #tpu.memory_space<vmem>>, %arg4: memref<512x256xbf16, #tpu.memory_space<vmem>>, %arg5: memref<1x256xf32, #tpu.memory_space<vmem>>, %arg6: memref<2x256xf32, #tpu.memory_space<vmem>>) attributes {dimension_semantics = [#tpu.dimension_semantics<parallel>], iteration_bounds = array<i64: 1>, scalar_prefetch = 0 : i64, scratch_operands = 0 : i64, tpu.core_type = #tpu.core_type<tc>, window_params = [{transform_indices = @transform_0, window_bounds = array<i64: 2, 256>}, {pipeline_mode = #tpu.pipeline_mode<synchronous>, transform_indices = @transform_1, window_bounds = array<i64: 256, 512>}, {pipeline_mode = #tpu.pipeline_mode<synchronous>, transform_indices = @transform_2, window_bounds = array<i64: 1, 512>}, {pipeline_mode = #tpu.pipeline_mode<synchronous>, transform_indices = @transform_3, window_bounds = array<i64: 512, 256>}, {pipeline_mode = #tpu.pipeline_mode<synchronous>, transform_indices = @transform_4, window_bounds = array<i64: 1, 256>}, {transform_indices = @transform_5, window_bounds = array<i64: 2, 256>}]} {
    %c0 = arith.constant 0 : index
    %c0_0 = arith.constant 0 : index
    %0 = vector.load %arg1[%c0, %c0_0] : memref<2x256xf32, #tpu.memory_space<vmem>>, vector<2x256xf32>
    %1 = arith.truncf %0 : vector<2x256xf32> to vector<2x256xbf16>
    %c0_1 = arith.constant 0 : index
    %c0_2 = arith.constant 0 : index
    %2 = vector.load %arg2[%c0_1, %c0_2] : memref<256x512xbf16, #tpu.memory_space<vmem>>, vector<256x512xbf16>
    %cst = arith.constant dense<0.000000e+00> : vector<2x512xf32>
    %3 = tpu.matmul %1, %2, %cst {dimension_numbers = #tpu.dot_dimension_numbers<[1], [0], [0], [1], [0, 0, 1, 1], [], []>} : vector<2x256xbf16>, vector<256x512xbf16>, vector<2x512xf32> -> vector<2x512xf32>
    %c0_3 = arith.constant 0 : index
    %c0_4 = arith.constant 0 : index
    %4 = vector.load %arg3[%c0_3, %c0_4] : memref<1x512xf32, #tpu.memory_space<vmem>>, vector<1x512xf32>
    %5 = vector.broadcast %4 : vector<1x512xf32> to vector<2x512xf32>
    %6 = arith.addf %3, %5 : vector<2x512xf32>
    %cst_5 = arith.constant 0.000000e+00 : f32
    %7 = vector.broadcast %cst_5 : f32 to vector<2x512xf32>
    %8 = arith.subf %7, %6 : vector<2x512xf32>
    %9 = math.exp %8 : vector<2x512xf32>
    %cst_6 = arith.constant 1.000000e+00 : f32
    %10 = vector.broadcast %cst_6 : f32 to vector<2x512xf32>
    %11 = arith.addf %10, %9 : vector<2x512xf32>
    %12 = tpu.reciprocal %11 {approx = true} : vector<2x512xf32> -> vector<2x512xf32>
    %13 = arith.mulf %6, %12 : vector<2x512xf32>
    %14 = arith.truncf %13 : vector<2x512xf32> to vector<2x512xbf16>
    %c0_7 = arith.constant 0 : index
    %c0_8 = arith.constant 0 : index
    %15 = vector.load %arg4[%c0_7, %c0_8] : memref<512x256xbf16, #tpu.memory_space<vmem>>, vector<512x256xbf16>
    %cst_9 = arith.constant dense<0.000000e+00> : vector<2x256xf32>
    %16 = tpu.matmul %14, %15, %cst_9 {dimension_numbers = #tpu.dot_dimension_numbers<[1], [0], [0], [1], [0, 0, 1, 1], [], []>} : vector<2x512xbf16>, vector<512x256xbf16>, vector<2x256xf32> -> vector<2x256xf32>
    %c0_10 = arith.constant 0 : index
    %c0_11 = arith.constant 0 : index
    %17 = vector.load %arg5[%c0_10, %c0_11] : memref<1x256xf32, #tpu.memory_space<vmem>>, vector<1x256xf32>
    %18 = vector.broadcast %17 : vector<1x256xf32> to vector<2x256xf32>
    %19 = arith.addf %16, %18 : vector<2x256xf32>
    %c0_12 = arith.constant 0 : index
    %c0_13 = arith.constant 0 : index
    %20 = vector.load %arg6[%c0_12, %c0_13] : memref<2x256xf32, #tpu.memory_space<vmem>>, vector<2x256xf32>
    tpu.vector_store %arg6[%c0_12, %c0_13], %19 {strides = array<i32>} : memref<2x256xf32, #tpu.memory_space<vmem>>, vector<2x256xf32>,
    return
  }
  func.func @transform_0(%arg0: i32) -> (i32, i32) {
    %c0_i32 = arith.constant 0 : i32
    %c0_i32_0 = arith.constant 0 : i32
    return %arg0, %c0_i32 : i32, i32
  }
  func.func @transform_1(%arg0: i32) -> (i32, i32) {
    %c0_i32 = arith.constant 0 : i32
    %c0_i32_0 = arith.constant 0 : i32
    %c0_i32_1 = arith.constant 0 : i32
    return %c0_i32, %c0_i32_0 : i32, i32
  }
  func.func @transform_2(%arg0: i32) -> (i32, i32) {
    %c0_i32 = arith.constant 0 : i32
    %c0_i32_0 = arith.constant 0 : i32
    %c0_i32_1 = arith.constant 0 : i32
    return %c0_i32, %c0_i32_0 : i32, i32
  }
  func.func @transform_3(%arg0: i32) -> (i32, i32) {
    %c0_i32 = arith.constant 0 : i32
    %c0_i32_0 = arith.constant 0 : i32
    %c0_i32_1 = arith.constant 0 : i32
    return %c0_i32, %c0_i32_0 : i32, i32
  }
  func.func @transform_4(%arg0: i32) -> (i32, i32) {
    %c0_i32 = arith.constant 0 : i32
    %c0_i32_0 = arith.constant 0 : i32
    %c0_i32_1 = arith.constant 0 : i32
    return %c0_i32, %c0_i32_0 : i32, i32
  }
  func.func @transform_5(%arg0: i32) -> (i32, i32) {
    %c0_i32 = arith.constant 0 : i32
    %c0_i32_0 = arith.constant 0 : i32
    return %arg0, %c0_i32 : i32, i32
  }
}

</mosaic_0001>

<llo_original>
// kernel: tpu_custom_call.1
$region0: #{tpu_custom_call.1}
  #allocation0 [shape = 'u32[]', space=smem, size = 0x4, offset = 0x4, fixed_abs, tag = 'smem constant byte address 0x4 - core index']
  #allocation1 [shape = 'u32[144,128]{1,0:T(1,128)}', space=vmem, size = 0x12000, scoped, tag = 'internal scratch']
  %s0 = inlined_call_operand.hbm [shape: f32[2,256], index: 0, kind: input, shape index: {}]
  %s1 = inlined_call_operand.hbm [shape: bf16[256,512], index: 1, kind: input, shape index: {}]
  %s2 = inlined_call_operand.vmem [shape: f32[1,512], index: 2, kind: input, shape index: {}]
  %s3 = inlined_call_operand.hbm [shape: bf16[512,256], index: 3, kind: input, shape index: {}]
  %s4 = inlined_call_operand.vmem [shape: f32[1,256], index: 4, kind: input, shape index: {}]
  %s5 = inlined_call_operand.hbm [shape: f32[2,256], index: 5, kind: output, shape index: {}]
  %s6 = sld [smem:[#allocation0]]
  $region42: #{tpu_custom_call.1} parent=0
    _
  %s8 = ssub.s32 1, %s6
  %s9 = scalar_select 0, %s8, %s6
  $region1: #{tpu_custom_call.1} parent=0
    #allocation2 [shape = 'u8[2048]{0}', space=vmem, size = 0x800, scoped, tag = 'input window, operand 0, single buffered']
    #allocation3 [shape = 's32[1]{0}', space=sflag, size = 0x4, scoped, tag = 'scoped memory for tpu_custom_call.1']
    #allocation4 [shape = 's32[1]{0}', space=sflag, size = 0x4, scoped, tag = 'scoped memory for tpu_custom_call.1']
    #allocation5 [shape = 'u8[262144]{0}', space=vmem, size = 0x40000, scoped, tag = 'input window, operand 1, single buffered']
    #allocation6 [shape = 's32[1]{0}', space=sflag, size = 0x4, scoped, tag = 'scoped memory for tpu_custom_call.1']
    #allocation7 [shape = 'u8[262144]{0}', space=vmem, size = 0x40000, scoped, tag = 'input window, operand 3, single buffered']
    #allocation8 [shape = 'u8[2048]{0}', space=vmem, size = 0x800, scoped, tag = 'output window, operand 0, single buffered']
    %10 = vsyncpa [#allocation3], 0
    %11 = vsyncpa [#allocation6], 0
    %12 = vsyncpa [#allocation4], 0
    // Predicated region
    $region2: #{tpu_custom_call.1} parent=1 // pred_check
      _
    $region3: #{tpu_custom_call.1} parent=1 // pred_check_branch
      %14 = sbr.rel (0) target = $region5
    $region4: #{tpu_custom_call.1} parent=1 // pred_region
      %s16 = ssub.s32 64, 64
      %17 = vsyncadd [#allocation3], %s16
      %s19 = sshll.u32 [#allocation2], 4
      %s20 = int_to_ptr.vmem [resolvable:$true] %s19
      %22 = dma.hbm_to_vmem [thread:$0]  %s0, 64, %s20, [#allocation3]
    $region5: #{tpu_custom_call.1} parent=1 // pred_fallthru
      _
    // Predicated region
    $region6: #{tpu_custom_call.1} parent=1 // pred_check
      _
    $region7: #{tpu_custom_call.1} parent=1 // pred_check_branch
      %24 = sbr.rel (0) target = $region9
    $region8: #{tpu_custom_call.1} parent=1 // pred_region
      %s26 = ssub.s32 8192, 8192
      %27 = vsyncadd [#allocation6], %s26
      %s28 = sshll.u32 [#allocation5], 4
      %s29 = int_to_ptr.vmem [resolvable:$true] %s28
      %34 = dma.hbm_to_vmem [thread:$0]  %s1, 8192, %s29, [#allocation6], 256, 256, 16
    $region9: #{tpu_custom_call.1} parent=1 // pred_fallthru
      _
    // Predicated region
    $region10: #{tpu_custom_call.1} parent=1 // pred_check
      _
    $region11: #{tpu_custom_call.1} parent=1 // pred_check_branch
      %36 = sbr.rel (0) target = $region13
    $region12: #{tpu_custom_call.1} parent=1 // pred_region
      _
    $region13: #{tpu_custom_call.1} parent=1 // pred_fallthru
      _
    // Predicated region
    $region14: #{tpu_custom_call.1} parent=1 // pred_check
      _
    $region15: #{tpu_custom_call.1} parent=1 // pred_check_branch
      %38 = sbr.rel (0) target = $region17
    $region16: #{tpu_custom_call.1} parent=1 // pred_region
      %s40 = ssub.s32 8192, 8192
      %41 = vsyncadd [#allocation6], %s40
      %s42 = sshll.u32 [#allocation7], 4
      %s43 = int_to_ptr.vmem [resolvable:$true] %s42
      %48 = dma.hbm_to_vmem [thread:$0]  %s3, 8192, %s43, [#allocation6], 128, 128, 8
    $region17: #{tpu_custom_call.1} parent=1 // pred_fallthru
      _
    // Predicated region
    $region18: #{tpu_custom_call.1} parent=1 // pred_check
      _
    $region19: #{tpu_custom_call.1} parent=1 // pred_check_branch
      %50 = sbr.rel (0) target = $region21
    $region20: #{tpu_custom_call.1} parent=1 // pred_region
      _
    $region21: #{tpu_custom_call.1} parent=1 // pred_fallthru
      _
    // Predicated region
    $region22: #{tpu_custom_call.1} parent=1 // pred_check
      _
    $region23: #{tpu_custom_call.1} parent=1 // pred_check_branch
      %52 = sbr.rel (0) target = $region25
    $region24: #{tpu_custom_call.1} parent=1 // pred_region
      %53 = dma.done [#allocation3], 64
    $region25: #{tpu_custom_call.1} parent=1 // pred_fallthru
      _
    // Predicated region
    $region26: #{tpu_custom_call.1} parent=1 // pred_check
      _
    $region27: #{tpu_custom_call.1} parent=1 // pred_check_branch
      %55 = sbr.rel (0) target = $region29
    $region28: #{tpu_custom_call.1} parent=1 // pred_region
      %56 = dma.done [#allocation6], 8192
    $region29: #{tpu_custom_call.1} parent=1 // pred_fallthru
      _
    // Predicated region
    $region30: #{tpu_custom_call.1} parent=1 // pred_check
      _
    $region31: #{tpu_custom_call.1} parent=1 // pred_check_branch
      %58 = sbr.rel (0) target = $region33
    $region32: #{tpu_custom_call.1} parent=1 // pred_region
      %59 = dma.done [#allocation6], 8192
    $region33: #{tpu_custom_call.1} parent=1 // pred_fallthru
      _
    %v60 = vld [vmem:[#allocation2] sm:$0xf]
    %v63 = vunpack.c.l.s4 1983009808
    %v64 = vunpack.c.0.s8 %v63
    %v65 = vlaneseq
    %v66 = vshrl.u32 %v65, 7
    %v67 = vsub.s32 %v64, %v66
    %v68 = vrot.slane %v60, %v67
    %v69 = vcombine.high %v68, %v68
    %v72 = vpack.c.bf16 %v68, %v68
    %v73 = vpack.c.bf16 %v69, %v69
    %v74 = vld [vmem:[#allocation5] sm:$0xff]
    %v75 = vld [vmem:[#allocation5 + $0x8] sm:$0xff]
    %v76 = vld [vmem:[#allocation5 + $0x10] sm:$0xff]
    %v77 = vld [vmem:[#allocation5 + $0x18] sm:$0xff]
    %v78 = vld [vmem:[#allocation5 + $0x20] sm:$0xff]
    %v79 = vld [vmem:[#allocation5 + $0x28] sm:$0xff]
    %v80 = vld [vmem:[#allocation5 + $0x30] sm:$0xff]
    %v81 = vld [vmem:[#allocation5 + $0x38] sm:$0xff]
    %v82 = vld [vmem:[#allocation5 + $0x40] sm:$0xff]
    %v83 = vld [vmem:[#allocation5 + $0x48] sm:$0xff]
    %v84 = vld [vmem:[#allocation5 + $0x50] sm:$0xff]
    %v85 = vld [vmem:[#allocation5 + $0x58] sm:$0xff]
    %v86 = vld [vmem:[#allocation5 + $0x60] sm:$0xff]
    %v87 = vld [vmem:[#allocation5 + $0x68] sm:$0xff]
    %v88 = vld [vmem:[#allocation5 + $0x70] sm:$0xff]
    %v89 = vld [vmem:[#allocation5 + $0x78] sm:$0xff]
    %v90 = vld [vmem:[#allocation5 + $0x80] sm:$0xff]
    %v91 = vld [vmem:[#allocation5 + $0x88] sm:$0xff]
    %v92 = vld [vmem:[#allocation5 + $0x90] sm:$0xff]
    %v93 = vld [vmem:[#allocation5 + $0x98] sm:$0xff]
    %v94 = vld [vmem:[#allocation5 + $0xa0] sm:$0xff]
    %v95 = vld [vmem:[#allocation5 + $0xa8] sm:$0xff]
    %v96 = vld [vmem:[#allocation5 + $0xb0] sm:$0xff]
    %v97 = vld [vmem:[#allocation5 + $0xb8] sm:$0xff]
    %v98 = vld [vmem:[#allocation5 + $0xc0] sm:$0xff]
    %v99 = vld [vmem:[#allocation5 + $0xc8] sm:$0xff]
    %v100 = vld [vmem:[#allocation5 + $0xd0] sm:$0xff]
    %v101 = vld [vmem:[#allocation5 + $0xd8] sm:$0xff]
    %v102 = vld [vmem:[#allocation5 + $0xe0] sm:$0xff]
    %v103 = vld [vmem:[#allocation5 + $0xe8] sm:$0xff]
    %v104 = vld [vmem:[#allocation5 + $0xf0] sm:$0xff]
    %v105 = vld [vmem:[#allocation5 + $0xf8] sm:$0xff]
    %v106 = vld [vmem:[#allocation5 + $0x100] sm:$0xff]
    %v107 = vld [vmem:[#allocation5 + $0x108] sm:$0xff]
    %v108 = vld [vmem:[#allocation5 + $0x110] sm:$0xff]
    %v109 = vld [vmem:[#allocation5 + $0x118] sm:$0xff]
    %v110 = vld [vmem:[#allocation5 + $0x120] sm:$0xff]
    %v111 = vld [vmem:[#allocation5 + $0x128] sm:$0xff]
    %v112 = vld [vmem:[#allocation5 + $0x130] sm:$0xff]
    %v113 = vld [vmem:[#allocation5 + $0x138] sm:$0xff]
    %v114 = vld [vmem:[#allocation5 + $0x140] sm:$0xff]
    %v115 = vld [vmem:[#allocation5 + $0x148] sm:$0xff]
    %v116 = vld [vmem:[#allocation5 + $0x150] sm:$0xff]
    %v117 = vld [vmem:[#allocation5 + $0x158] sm:$0xff]
    %v118 = vld [vmem:[#allocation5 + $0x160] sm:$0xff]
    %v119 = vld [vmem:[#allocation5 + $0x168] sm:$0xff]
    %v120 = vld [vmem:[#allocation5 + $0x170] sm:$0xff]
    %v121 = vld [vmem:[#allocation5 + $0x178] sm:$0xff]
    %v122 = vld [vmem:[#allocation5 + $0x180] sm:$0xff]
    %v123 = vld [vmem:[#allocation5 + $0x188] sm:$0xff]
    %v124 = vld [vmem:[#allocation5 + $0x190] sm:$0xff]
    %v125 = vld [vmem:[#allocation5 + $0x198] sm:$0xff]
    %v126 = vld [vmem:[#allocation5 + $0x1a0] sm:$0xff]
    %v127 = vld [vmem:[#allocation5 + $0x1a8] sm:$0xff]
    %v128 = vld [vmem:[#allocation5 + $0x1b0] sm:$0xff]
    %v129 = vld [vmem:[#allocation5 + $0x1b8] sm:$0xff]
    %v130 = vld [vmem:[#allocation5 + $0x1c0] sm:$0xff]
    %v131 = vld [vmem:[#allocation5 + $0x1c8] sm:$0xff]
    %v132 = vld [vmem:[#allocation5 + $0x1d0] sm:$0xff]
    %v133 = vld [vmem:[#allocation5 + $0x1d8] sm:$0xff]
    %v134 = vld [vmem:[#allocation5 + $0x1e0] sm:$0xff]
    %v135 = vld [vmem:[#allocation5 + $0x1e8] sm:$0xff]
    %v136 = vld [vmem:[#allocation5 + $0x1f0] sm:$0xff]
    %v137 = vld [vmem:[#allocation5 + $0x1f8] sm:$0xff]
    %v138 = vld [vmem:[%s2] sm:$0xf]
    %v140 = vlaneseq
    %v141 = vshrl.u32 %v140, 7
    %v142 = vsub.s32 0, %v141
    %v143 = vrot.slane %v138, %v142
    %v144 = vlaneseq
    %v145 = vshrl.u32 %v144, 7
    %v146 = vsub.s32 1, %v145
    %v147 = vrot.slane %v138, %v146
    %v148 = vlaneseq
    %v149 = vshrl.u32 %v148, 7
    %v150 = vsub.s32 2, %v149
    %v151 = vrot.slane %v138, %v150
    %v152 = vlaneseq
    %v153 = vshrl.u32 %v152, 7
    %v154 = vsub.s32 3, %v153
    %v155 = vrot.slane %v138, %v154
    %v224 = vunpack.c.l.b16 %v74
    %v225 = vunpack.c.h.b16 %v74
    %v226 = vunpack.c.l.b16 %v75
    %v227 = vunpack.c.h.b16 %v75
    %v228 = vunpack.c.l.b16 %v76
    %v229 = vunpack.c.h.b16 %v76
    %v230 = vunpack.c.l.b16 %v77
    %v231 = vunpack.c.h.b16 %v77
    %v232 = vunpack.c.l.b16 %v78
    %v233 = vunpack.c.h.b16 %v78
    %v234 = vunpack.c.l.b16 %v79
    %v235 = vunpack.c.h.b16 %v79
    %v236 = vunpack.c.l.b16 %v80
    %v237 = vunpack.c.h.b16 %v80
    %v238 = vunpack.c.l.b16 %v81
    %v239 = vunpack.c.h.b16 %v81
    %v240 = vunpack.c.l.b16 %v82
    %v241 = vunpack.c.h.b16 %v82
    %v242 = vunpack.c.l.b16 %v83
    %v243 = vunpack.c.h.b16 %v83
    %v244 = vunpack.c.l.b16 %v84
    %v245 = vunpack.c.h.b16 %v84
    %v246 = vunpack.c.l.b16 %v85
    %v247 = vunpack.c.h.b16 %v85
    %v248 = vunpack.c.l.b16 %v86
    %v249 = vunpack.c.h.b16 %v86
    %v250 = vunpack.c.l.b16 %v87
    %v251 = vunpack.c.h.b16 %v87
    %v252 = vunpack.c.l.b16 %v88
    %v253 = vunpack.c.h.b16 %v88
    %v254 = vunpack.c.l.b16 %v89
    %v255 = vunpack.c.h.b16 %v89
    %v256 = vunpack.c.l.b16 %v90
    %v257 = vunpack.c.h.b16 %v90
    %v258 = vunpack.c.l.b16 %v91
    %v259 = vunpack.c.h.b16 %v91
    %v260 = vunpack.c.l.b16 %v92
    %v261 = vunpack.c.h.b16 %v92
    %v262 = vunpack.c.l.b16 %v93
    %v263 = vunpack.c.h.b16 %v93
    %v264 = vunpack.c.l.b16 %v94
    %v265 = vunpack.c.h.b16 %v94
    %v266 = vunpack.c.l.b16 %v95
    %v267 = vunpack.c.h.b16 %v95
    %v268 = vunpack.c.l.b16 %v96
    %v269 = vunpack.c.h.b16 %v96
    %v270 = vunpack.c.l.b16 %v97
    %v271 = vunpack.c.h.b16 %v97
    %v272 = vunpack.c.l.b16 %v98
    %v273 = vunpack.c.h.b16 %v98
    %v274 = vunpack.c.l.b16 %v99
    %v275 = vunpack.c.h.b16 %v99
    %v276 = vunpack.c.l.b16 %v100
    %v277 = vunpack.c.h.b16 %v100
    %v278 = vunpack.c.l.b16 %v101
    %v279 = vunpack.c.h.b16 %v101
    %v280 = vunpack.c.l.b16 %v102
    %v281 = vunpack.c.h.b16 %v102
    %v282 = vunpack.c.l.b16 %v103
    %v283 = vunpack.c.h.b16 %v103
    %v284 = vunpack.c.l.b16 %v104
    %v285 = vunpack.c.h.b16 %v104
    %v286 = vunpack.c.l.b16 %v105
    %v287 = vunpack.c.h.b16 %v105
    %v288 = vunpack.c.l.b16 %v106
    %v289 = vunpack.c.h.b16 %v106
    %v290 = vunpack.c.l.b16 %v107
    %v291 = vunpack.c.h.b16 %v107
    %v292 = vunpack.c.l.b16 %v108
    %v293 = vunpack.c.h.b16 %v108
    %v294 = vunpack.c.l.b16 %v109
    %v295 = vunpack.c.h.b16 %v109
    %v296 = vunpack.c.l.b16 %v110
    %v297 = vunpack.c.h.b16 %v110
    %v298 = vunpack.c.l.b16 %v111
    %v299 = vunpack.c.h.b16 %v111
    %v300 = vunpack.c.l.b16 %v112
    %v301 = vunpack.c.h.b16 %v112
    %v302 = vunpack.c.l.b16 %v113
    %v303 = vunpack.c.h.b16 %v113
    %v304 = vunpack.c.l.b16 %v114
    %v305 = vunpack.c.h.b16 %v114
    %v306 = vunpack.c.l.b16 %v115
    %v307 = vunpack.c.h.b16 %v115
    %v308 = vunpack.c.l.b16 %v116
    %v309 = vunpack.c.h.b16 %v116
    %v310 = vunpack.c.l.b16 %v117
    %v311 = vunpack.c.h.b16 %v117
    %v312 = vunpack.c.l.b16 %v118
    %v313 = vunpack.c.h.b16 %v118
    %v314 = vunpack.c.l.b16 %v119
    %v315 = vunpack.c.h.b16 %v119
    %v316 = vunpack.c.l.b16 %v120
    %v317 = vunpack.c.h.b16 %v120
    %v318 = vunpack.c.l.b16 %v121
    %v319 = vunpack.c.h.b16 %v121
    %v320 = vunpack.c.l.b16 %v122
    %v321 = vunpack.c.h.b16 %v122
    %v322 = vunpack.c.l.b16 %v123
    %v323 = vunpack.c.h.b16 %v123
    %v324 = vunpack.c.l.b16 %v124
    %v325 = vunpack.c.h.b16 %v124
    %v326 = vunpack.c.l.b16 %v125
    %v327 = vunpack.c.h.b16 %v125
    %v328 = vunpack.c.l.b16 %v126
    %v329 = vunpack.c.h.b16 %v126
    %v330 = vunpack.c.l.b16 %v127
    %v331 = vunpack.c.h.b16 %v127
    %v332 = vunpack.c.l.b16 %v128
    %v333 = vunpack.c.h.b16 %v128
    %v334 = vunpack.c.l.b16 %v129
    %v335 = vunpack.c.h.b16 %v129
    %v336 = vunpack.c.l.b16 %v130
    %v337 = vunpack.c.h.b16 %v130
    %v338 = vunpack.c.l.b16 %v131
    %v339 = vunpack.c.h.b16 %v131
    %v340 = vunpack.c.l.b16 %v132
    %v341 = vunpack.c.h.b16 %v132
    %v342 = vunpack.c.l.b16 %v133
    %v343 = vunpack.c.h.b16 %v133
    %v344 = vunpack.c.l.b16 %v134
    %v345 = vunpack.c.h.b16 %v134
    %v346 = vunpack.c.l.b16 %v135
    %v347 = vunpack.c.h.b16 %v135
    %v348 = vunpack.c.l.b16 %v136
    %v349 = vunpack.c.h.b16 %v136
    %v350 = vunpack.c.l.b16 %v137
    %v351 = vunpack.c.h.b16 %v137
    %v352 = vpack.c.b16 %v228, %v224
    %v353 = vpack.c.b16 %v229, %v225
    %v354 = vpack.c.b16 %v230, %v226
    %v355 = vpack.c.b16 %v231, %v227
    %v356 = vpack.c.b16 %v236, %v232
    %v357 = vpack.c.b16 %v237, %v233
    %v358 = vpack.c.b16 %v238, %v234
    %v359 = vpack.c.b16 %v239, %v235
    %v360 = vpack.c.b16 %v244, %v240
    %v361 = vpack.c.b16 %v245, %v241
    %v362 = vpack.c.b16 %v246, %v242
    %v363 = vpack.c.b16 %v247, %v243
    %v364 = vpack.c.b16 %v252, %v248
    %v365 = vpack.c.b16 %v253, %v249
    %v366 = vpack.c.b16 %v254, %v250
    %v367 = vpack.c.b16 %v255, %v251
    %v368 = vpack.c.b16 %v260, %v256
    %v369 = vpack.c.b16 %v261, %v257
    %v370 = vpack.c.b16 %v262, %v258
    %v371 = vpack.c.b16 %v263, %v259
    %v372 = vpack.c.b16 %v268, %v264
    %v373 = vpack.c.b16 %v269, %v265
    %v374 = vpack.c.b16 %v270, %v266
    %v375 = vpack.c.b16 %v271, %v267
    %v376 = vpack.c.b16 %v276, %v272
    %v377 = vpack.c.b16 %v277, %v273
    %v378 = vpack.c.b16 %v278, %v274
    %v379 = vpack.c.b16 %v279, %v275
    %v380 = vpack.c.b16 %v284, %v280
    %v381 = vpack.c.b16 %v285, %v281
    %v382 = vpack.c.b16 %v286, %v282
    %v383 = vpack.c.b16 %v287, %v283
    %v384 = vpack.c.b16 %v292, %v288
    %v385 = vpack.c.b16 %v293, %v289
    %v386 = vpack.c.b16 %v294, %v290
    %v387 = vpack.c.b16 %v295, %v291
    %v388 = vpack.c.b16 %v300, %v296
    %v389 = vpack.c.b16 %v301, %v297
    %v390 = vpack.c.b16 %v302, %v298
    %v391 = vpack.c.b16 %v303, %v299
    %v392 = vpack.c.b16 %v308, %v304
    %v393 = vpack.c.b16 %v309, %v305
    %v394 = vpack.c.b16 %v310, %v306
    %v395 = vpack.c.b16 %v311, %v307
    %v396 = vpack.c.b16 %v316, %v312
    %v397 = vpack.c.b16 %v317, %v313
    %v398 = vpack.c.b16 %v318, %v314
    %v399 = vpack.c.b16 %v319, %v315
    %v400 = vpack.c.b16 %v324, %v320
    %v401 = vpack.c.b16 %v325, %v321
    %v402 = vpack.c.b16 %v326, %v322
    %v403 = vpack.c.b16 %v327, %v323
    %v404 = vpack.c.b16 %v332, %v328
    %v405 = vpack.c.b16 %v333, %v329
    %v406 = vpack.c.b16 %v334, %v330
    %v407 = vpack.c.b16 %v335, %v331
    %v408 = vpack.c.b16 %v340, %v336
    %v409 = vpack.c.b16 %v341, %v337
    %v410 = vpack.c.b16 %v342, %v338
    %v411 = vpack.c.b16 %v343, %v339
    %v412 = vpack.c.b16 %v348, %v344
    %v413 = vpack.c.b16 %v349, %v345
    %v414 = vpack.c.b16 %v350, %v346
    %v415 = vpack.c.b16 %v351, %v347
    %480 = vmatprep.subr.bf16.mxu0 %v353
    %481 = vmatpush1.bf16.msra.mxu0 %v352
    %482 = vmatprep.subr.bf16.mxu0 %v357
    %483 = vmatpush1.bf16.msra.mxu0 %v356
    %484 = vmatprep.subr.bf16.mxu0 %v361
    %485 = vmatpush1.bf16.msra.mxu0 %v360
    %486 = vmatprep.subr.bf16.mxu0 %v365
    %487 = vmatpush1.bf16.msra.mxu0 %v364
    %488 = vmatprep.subr.bf16.mxu0 %v369
    %489 = vmatpush1.bf16.msra.mxu0 %v368
    %490 = vmatprep.subr.bf16.mxu0 %v373
    %491 = vmatpush1.bf16.msra.mxu0 %v372
    %492 = vmatprep.subr.bf16.mxu0 %v377
    %493 = vmatpush1.bf16.msra.mxu0 %v376
    %494 = vmatprep.subr.bf16.mxu0 %v381
    %495 = vmatpush1.bf16.msra.mxu0 %v380
    %496 = vmatprep.subr.bf16.mxu0 %v385
    %497 = vmatpush1.bf16.msra.mxu0 %v384
    %498 = vmatprep.subr.bf16.mxu0 %v389
    %499 = vmatpush1.bf16.msra.mxu0 %v388
    %500 = vmatprep.subr.bf16.mxu0 %v393
    %501 = vmatpush1.bf16.msra.mxu0 %v392
    %502 = vmatprep.subr.bf16.mxu0 %v397
    %503 = vmatpush1.bf16.msra.mxu0 %v396
    %504 = vmatprep.subr.bf16.mxu0 %v401
    %505 = vmatpush1.bf16.msra.mxu0 %v400
    %506 = vmatprep.subr.bf16.mxu0 %v405
    %507 = vmatpush1.bf16.msra.mxu0 %v404
    %508 = vmatprep.subr.bf16.mxu0 %v409
    %509 = vmatpush1.bf16.msra.mxu0 %v408
    %510 = vmatprep.subr.bf16.mxu0 %v413
    %511 = vmatpush1.bf16.msra.mxu0 %v412
    %512 = vmatprep.mubr.bf16.mxu0 %v73
    %513 = vmatmul.mubr.bf16.gmra.mrb[0].mxu0 %v72
    %v514 = vpop.f32.mrb[0].mxu0
    %v515 = vadd.f32 %v143, %v514
    %v516 = vpop.f32.mrb[0].mxu0
    %v517 = vadd.f32 %v147, %v516
    %v518 = vpop.f32.mrb[0].mxu0
    %v519 = vpop.f32.mrb[0].mxu0
    %520 = vdwg.mxu0
    %521 = vmatprep.subr.bf16.mxu0 %v355
    %522 = vmatpush1.bf16.msra.mxu0 %v354
    %523 = vmatprep.subr.bf16.mxu0 %v359
    %524 = vmatpush1.bf16.msra.mxu0 %v358
    %525 = vmatprep.subr.bf16.mxu0 %v363
    %526 = vmatpush1.bf16.msra.mxu0 %v362
    %527 = vmatprep.subr.bf16.mxu0 %v367
    %528 = vmatpush1.bf16.msra.mxu0 %v366
    %529 = vmatprep.subr.bf16.mxu0 %v371
    %530 = vmatpush1.bf16.msra.mxu0 %v370
    %531 = vmatprep.subr.bf16.mxu0 %v375
    %532 = vmatpush1.bf16.msra.mxu0 %v374
    %533 = vmatprep.subr.bf16.mxu0 %v379
    %534 = vmatpush1.bf16.msra.mxu0 %v378
    %535 = vmatprep.subr.bf16.mxu0 %v383
    %536 = vmatpush1.bf16.msra.mxu0 %v382
    %537 = vmatprep.subr.bf16.mxu0 %v387
    %538 = vmatpush1.bf16.msra.mxu0 %v386
    %539 = vmatprep.subr.bf16.mxu0 %v391
    %540 = vmatpush1.bf16.msra.mxu0 %v390
    %541 = vmatprep.subr.bf16.mxu0 %v395
    %542 = vmatpush1.bf16.msra.mxu0 %v394
    %543 = vmatprep.subr.bf16.mxu0 %v399
    %544 = vmatpush1.bf16.msra.mxu0 %v398
    %545 = vmatprep.subr.bf16.mxu0 %v403
    %546 = vmatpush1.bf16.msra.mxu0 %v402
    %547 = vmatprep.subr.bf16.mxu0 %v407
    %548 = vmatpush1.bf16.msra.mxu0 %v406
    %549 = vmatprep.subr.bf16.mxu0 %v411
    %550 = vmatpush1.bf16.msra.mxu0 %v410
    %551 = vmatprep.subr.bf16.mxu0 %v415
    %552 = vmatpush1.bf16.msra.mxu0 %v414
    %553 = vmatprep.mubr.bf16.mxu0 %v73
    %554 = vmatmul.mubr.bf16.gmra.mrb[0].mxu0 %v72
    %v555 = vpop.f32.mrb[0].mxu0
    %v556 = vadd.f32 %v151, %v555
    %v557 = vpop.f32.mrb[0].mxu0
    %v558 = vadd.f32 %v155, %v557
    %v559 = vpop.f32.mrb[0].mxu0
    %v560 = vpop.f32.mrb[0].mxu0
    %561 = vdwg.mxu0
    %v562 = vsub.f32 0.0, %v515
    %v563 = vsub.f32 0.0, %v517
    %v564 = vsub.f32 0.0, %v556
    %v565 = vsub.f32 0.0, %v558
    %v566 = vmul.f32 %v562, 1.442695
    %v567 = vpow.pop %v566
    %v568 = vmul.f32 %v563, 1.442695
    %v569 = vpow.pop %v568
    %v570 = vmul.f32 %v564, 1.442695
    %v571 = vpow.pop %v570
    %v572 = vmul.f32 %v565, 1.442695
    %v573 = vpow.pop %v572
    %v574 = vadd.f32 %v567, 1.0
    %v575 = vadd.f32 %v569, 1.0
    %v576 = vadd.f32 %v571, 1.0
    %v577 = vadd.f32 %v573, 1.0
    %v578 = vrcp.pop %v574
    %v579 = vrcp.pop %v575
    %v580 = vrcp.pop %v576
    %v581 = vrcp.pop %v577
    %v582 = vmul.f32 %v515, %v578
    %v583 = vmul.f32 %v517, %v579
    %v584 = vmul.f32 %v556, %v580
    %v585 = vmul.f32 %v558, %v581
    %v586 = vpack.c.bf16 %v582, %v582
    %v587 = vpack.c.bf16 %v583, %v583
    %v588 = vpack.c.bf16 %v584, %v584
    %v589 = vpack.c.bf16 %v585, %v585
    %v590 = vld [vmem:[#allocation7] sm:$0xff]
    %v591 = vld [vmem:[#allocation7 + $0x8] sm:$0xff]
    %v592 = vld [vmem:[#allocation7 + $0x10] sm:$0xff]
    %v593 = vld [vmem:[#allocation7 + $0x18] sm:$0xff]
    %v594 = vld [vmem:[#allocation7 + $0x20] sm:$0xff]
    %v595 = vld [vmem:[#allocation7 + $0x28] sm:$0xff]
    %v596 = vld [vmem:[#allocation7 + $0x30] sm:$0xff]
    %v597 = vld [vmem:[#allocation7 + $0x38] sm:$0xff]
    %v598 = vld [vmem:[#allocation7 + $0x40] sm:$0xff]
    %v599 = vld [vmem:[#allocation7 + $0x48] sm:$0xff]
    %v600 = vld [vmem:[#allocation7 + $0x50] sm:$0xff]
    %v601 = vld [vmem:[#allocation7 + $0x58] sm:$0xff]
    %v602 = vld [vmem:[#allocation7 + $0x60] sm:$0xff]
    %v603 = vld [vmem:[#allocation7 + $0x68] sm:$0xff]
    %v604 = vld [vmem:[#allocation7 + $0x70] sm:$0xff]
    %v605 = vld [vmem:[#allocation7 + $0x78] sm:$0xff]
    %v606 = vld [vmem:[#allocation7 + $0x80] sm:$0xff]
    %v607 = vld [vmem:[#allocation7 + $0x88] sm:$0xff]
    %v608 = vld [vmem:[#allocation7 + $0x90] sm:$0xff]
    %v609 = vld [vmem:[#allocation7 + $0x98] sm:$0xff]
    %v610 = vld [vmem:[#allocation7 + $0xa0] sm:$0xff]
    %v611 = vld [vmem:[#allocation7 + $0xa8] sm:$0xff]
    %v612 = vld [vmem:[#allocation7 + $0xb0] sm:$0xff]
    %v613 = vld [vmem:[#allocation7 + $0xb8] sm:$0xff]
    %v614 = vld [vmem:[#allocation7 + $0xc0] sm:$0xff]
    %v615 = vld [vmem:[#allocation7 + $0xc8] sm:$0xff]
    %v616 = vld [vmem:[#allocation7 + $0xd0] sm:$0xff]
    %v617 = vld [vmem:[#allocation7 + $0xd8] sm:$0xff]
    %v618 = vld [vmem:[#allocation7 + $0xe0] sm:$0xff]
    %v619 = vld [vmem:[#allocation7 + $0xe8] sm:$0xff]
    %v620 = vld [vmem:[#allocation7 + $0xf0] sm:$0xff]
    %v621 = vld [vmem:[#allocation7 + $0xf8] sm:$0xff]
    %v622 = vld [vmem:[#allocation7 + $0x100] sm:$0xff]
    %v623 = vld [vmem:[#allocation7 + $0x108] sm:$0xff]
    %v624 = vld [vmem:[#allocation7 + $0x110] sm:$0xff]
    %v625 = vld [vmem:[#allocation7 + $0x118] sm:$0xff]
    %v626 = vld [vmem:[#allocation7 + $0x120] sm:$0xff]
    %v627 = vld [vmem:[#allocation7 + $0x128] sm:$0xff]
    %v628 = vld [vmem:[#allocation7 + $0x130] sm:$0xff]
    %v629 = vld [vmem:[#allocation7 + $0x138] sm:$0xff]
    %v630 = vld [vmem:[#allocation7 + $0x140] sm:$0xff]
    %v631 = vld [vmem:[#allocation7 + $0x148] sm:$0xff]
    %v632 = vld [vmem:[#allocation7 + $0x150] sm:$0xff]
    %v633 = vld [vmem:[#allocation7 + $0x158] sm:$0xff]
    %v634 = vld [vmem:[#allocation7 + $0x160] sm:$0xff]
    %v635 = vld [vmem:[#allocation7 + $0x168] sm:$0xff]
    %v636 = vld [vmem:[#allocation7 + $0x170] sm:$0xff]
    %v637 = vld [vmem:[#allocation7 + $0x178] sm:$0xff]
    %v638 = vld [vmem:[#allocation7 + $0x180] sm:$0xff]
    %v639 = vld [vmem:[#allocation7 + $0x188] sm:$0xff]
    %v640 = vld [vmem:[#allocation7 + $0x190] sm:$0xff]
    %v641 = vld [vmem:[#allocation7 + $0x198] sm:$0xff]
    %v642 = vld [vmem:[#allocation7 + $0x1a0] sm:$0xff]
    %v643 = vld [vmem:[#allocation7 + $0x1a8] sm:$0xff]
    %v644 = vld [vmem:[#allocation7 + $0x1b0] sm:$0xff]
    %v645 = vld [vmem:[#allocation7 + $0x1b8] sm:$0xff]
    %v646 = vld [vmem:[#allocation7 + $0x1c0] sm:$0xff]
    %v647 = vld [vmem:[#allocation7 + $0x1c8] sm:$0xff]
    %v648 = vld [vmem:[#allocation7 + $0x1d0] sm:$0xff]
    %v649 = vld [vmem:[#allocation7 + $0x1d8] sm:$0xff]
    %v650 = vld [vmem:[#allocation7 + $0x1e0] sm:$0xff]
    %v651 = vld [vmem:[#allocation7 + $0x1e8] sm:$0xff]
    %v652 = vld [vmem:[#allocation7 + $0x1f0] sm:$0xff]
    %v653 = vld [vmem:[#allocation7 + $0x1f8] sm:$0xff]
    %v654 = vld [vmem:[%s4] sm:$0x3]
    %v656 = vlaneseq
    %v657 = vshrl.u32 %v656, 7
    %v658 = vsub.s32 0, %v657
    %v659 = vrot.slane %v654, %v658
    %v660 = vlaneseq
    %v661 = vshrl.u32 %v660, 7
    %v662 = vsub.s32 1, %v661
    %v663 = vrot.slane %v654, %v662
    %v730 = vunpack.c.l.b16 %v590
    %v731 = vunpack.c.h.b16 %v590
    %v732 = vunpack.c.l.b16 %v591
    %v733 = vunpack.c.h.b16 %v591
    %v734 = vunpack.c.l.b16 %v592
    %v735 = vunpack.c.h.b16 %v592
    %v736 = vunpack.c.l.b16 %v593
    %v737 = vunpack.c.h.b16 %v593
    %v738 = vunpack.c.l.b16 %v594
    %v739 = vunpack.c.h.b16 %v594
    %v740 = vunpack.c.l.b16 %v595
    %v741 = vunpack.c.h.b16 %v595
    %v742 = vunpack.c.l.b16 %v596
    %v743 = vunpack.c.h.b16 %v596
    %v744 = vunpack.c.l.b16 %v597
    %v745 = vunpack.c.h.b16 %v597
    %v746 = vunpack.c.l.b16 %v598
    %v747 = vunpack.c.h.b16 %v598
    %v748 = vunpack.c.l.b16 %v599
    %v749 = vunpack.c.h.b16 %v599
    %v750 = vunpack.c.l.b16 %v600
    %v751 = vunpack.c.h.b16 %v600
    %v752 = vunpack.c.l.b16 %v601
    %v753 = vunpack.c.h.b16 %v601
    %v754 = vunpack.c.l.b16 %v602
    %v755 = vunpack.c.h.b16 %v602
    %v756 = vunpack.c.l.b16 %v603
    %v757 = vunpack.c.h.b16 %v603
    %v758 = vunpack.c.l.b16 %v604
    %v759 = vunpack.c.h.b16 %v604
    %v760 = vunpack.c.l.b16 %v605
    %v761 = vunpack.c.h.b16 %v605
    %v762 = vunpack.c.l.b16 %v606
    %v763 = vunpack.c.h.b16 %v606
    %v764 = vunpack.c.l.b16 %v607
    %v765 = vunpack.c.h.b16 %v607
    %v766 = vunpack.c.l.b16 %v608
    %v767 = vunpack.c.h.b16 %v608
    %v768 = vunpack.c.l.b16 %v609
    %v769 = vunpack.c.h.b16 %v609
    %v770 = vunpack.c.l.b16 %v610
    %v771 = vunpack.c.h.b16 %v610
    %v772 = vunpack.c.l.b16 %v611
    %v773 = vunpack.c.h.b16 %v611
    %v774 = vunpack.c.l.b16 %v612
    %v775 = vunpack.c.h.b16 %v612
    %v776 = vunpack.c.l.b16 %v613
    %v777 = vunpack.c.h.b16 %v613
    %v778 = vunpack.c.l.b16 %v614
    %v779 = vunpack.c.h.b16 %v614
    %v780 = vunpack.c.l.b16 %v615
    %v781 = vunpack.c.h.b16 %v615
    %v782 = vunpack.c.l.b16 %v616
    %v783 = vunpack.c.h.b16 %v616
    %v784 = vunpack.c.l.b16 %v617
    %v785 = vunpack.c.h.b16 %v617
    %v786 = vunpack.c.l.b16 %v618
    %v787 = vunpack.c.h.b16 %v618
    %v788 = vunpack.c.l.b16 %v619
    %v789 = vunpack.c.h.b16 %v619
    %v790 = vunpack.c.l.b16 %v620
    %v791 = vunpack.c.h.b16 %v620
    %v792 = vunpack.c.l.b16 %v621
    %v793 = vunpack.c.h.b16 %v621
    %v794 = vunpack.c.l.b16 %v622
    %v795 = vunpack.c.h.b16 %v622
    %v796 = vunpack.c.l.b16 %v623
    %v797 = vunpack.c.h.b16 %v623
    %v798 = vunpack.c.l.b16 %v624
    %v799 = vunpack.c.h.b16 %v624
    %v800 = vunpack.c.l.b16 %v625
    %v801 = vunpack.c.h.b16 %v625
    %v802 = vunpack.c.l.b16 %v626
    %v803 = vunpack.c.h.b16 %v626
    %v804 = vunpack.c.l.b16 %v627
    %v805 = vunpack.c.h.b16 %v627
    %v806 = vunpack.c.l.b16 %v628
    %v807 = vunpack.c.h.b16 %v628
    %v808 = vunpack.c.l.b16 %v629
    %v809 = vunpack.c.h.b16 %v629
    %v810 = vunpack.c.l.b16 %v630
    %v811 = vunpack.c.h.b16 %v630
    %v812 = vunpack.c.l.b16 %v631
    %v813 = vunpack.c.h.b16 %v631
    %v814 = vunpack.c.l.b16 %v632
    %v815 = vunpack.c.h.b16 %v632
    %v816 = vunpack.c.l.b16 %v633
    %v817 = vunpack.c.h.b16 %v633
    %v818 = vunpack.c.l.b16 %v634
    %v819 = vunpack.c.h.b16 %v634
    %v820 = vunpack.c.l.b16 %v635
    %v821 = vunpack.c.h.b16 %v635
    %v822 = vunpack.c.l.b16 %v636
    %v823 = vunpack.c.h.b16 %v636
    %v824 = vunpack.c.l.b16 %v637
    %v825 = vunpack.c.h.b16 %v637
    %v826 = vunpack.c.l.b16 %v638
    %v827 = vunpack.c.h.b16 %v638
    %v828 = vunpack.c.l.b16 %v639
    %v829 = vunpack.c.h.b16 %v639
    %v830 = vunpack.c.l.b16 %v640
    %v831 = vunpack.c.h.b16 %v640
    %v832 = vunpack.c.l.b16 %v641
    %v833 = vunpack.c.h.b16 %v641
    %v834 = vunpack.c.l.b16 %v642
    %v835 = vunpack.c.h.b16 %v642
    %v836 = vunpack.c.l.b16 %v643
    %v837 = vunpack.c.h.b16 %v643
    %v838 = vunpack.c.l.b16 %v644
    %v839 = vunpack.c.h.b16 %v644
    %v840 = vunpack.c.l.b16 %v645
    %v841 = vunpack.c.h.b16 %v645
    %v842 = vunpack.c.l.b16 %v646
    %v843 = vunpack.c.h.b16 %v646
    %v844 = vunpack.c.l.b16 %v647
    %v845 = vunpack.c.h.b16 %v647
    %v846 = vunpack.c.l.b16 %v648
    %v847 = vunpack.c.h.b16 %v648
    %v848 = vunpack.c.l.b16 %v649
    %v849 = vunpack.c.h.b16 %v649
    %v850 = vunpack.c.l.b16 %v650
    %v851 = vunpack.c.h.b16 %v650
    %v852 = vunpack.c.l.b16 %v651
    %v853 = vunpack.c.h.b16 %v651
    %v854 = vunpack.c.l.b16 %v652
    %v855 = vunpack.c.h.b16 %v652
    %v856 = vunpack.c.l.b16 %v653
    %v857 = vunpack.c.h.b16 %v653
    %v858 = vpack.c.b16 %v732, %v730
    %v859 = vpack.c.b16 %v733, %v731
    %v860 = vpack.c.b16 %v736, %v734
    %v861 = vpack.c.b16 %v737, %v735
    %v862 = vpack.c.b16 %v740, %v738
    %v863 = vpack.c.b16 %v741, %v739
    %v864 = vpack.c.b16 %v744, %v742
    %v865 = vpack.c.b16 %v745, %v743
    %v866 = vpack.c.b16 %v748, %v746
    %v867 = vpack.c.b16 %v749, %v747
    %v868 = vpack.c.b16 %v752, %v750
    %v869 = vpack.c.b16 %v753, %v751
    %v870 = vpack.c.b16 %v756, %v754
    %v871 = vpack.c.b16 %v757, %v755
    %v872 = vpack.c.b16 %v760, %v758
    %v873 = vpack.c.b16 %v761, %v759
    %v874 = vpack.c.b16 %v764, %v762
    %v875 = vpack.c.b16 %v765, %v763
    %v876 = vpack.c.b16 %v768, %v766
    %v877 = vpack.c.b16 %v769, %v767
    %v878 = vpack.c.b16 %v772, %v770
    %v879 = vpack.c.b16 %v773, %v771
    %v880 = vpack.c.b16 %v776, %v774
    %v881 = vpack.c.b16 %v777, %v775
    %v882 = vpack.c.b16 %v780, %v778
    %v883 = vpack.c.b16 %v781, %v779
    %v884 = vpack.c.b16 %v784, %v782
    %v885 = vpack.c.b16 %v785, %v783
    %v886 = vpack.c.b16 %v788, %v786
    %v887 = vpack.c.b16 %v789, %v787
    %v888 = vpack.c.b16 %v792, %v790
    %v889 = vpack.c.b16 %v793, %v791
    %v890 = vpack.c.b16 %v796, %v794
    %v891 = vpack.c.b16 %v797, %v795
    %v892 = vpack.c.b16 %v800, %v798
    %v893 = vpack.c.b16 %v801, %v799
    %v894 = vpack.c.b16 %v804, %v802
    %v895 = vpack.c.b16 %v805, %v803
    %v896 = vpack.c.b16 %v808, %v806
    %v897 = vpack.c.b16 %v809, %v807
    %v898 = vpack.c.b16 %v812, %v810
    %v899 = vpack.c.b16 %v813, %v811
    %v900 = vpack.c.b16 %v816, %v814
    %v901 = vpack.c.b16 %v817, %v815
    %v902 = vpack.c.b16 %v820, %v818
    %v903 = vpack.c.b16 %v821, %v819
    %v904 = vpack.c.b16 %v824, %v822
    %v905 = vpack.c.b16 %v825, %v823
    %v906 = vpack.c.b16 %v828, %v826
    %v907 = vpack.c.b16 %v829, %v827
    %v908 = vpack.c.b16 %v832, %v830
    %v909 = vpack.c.b16 %v833, %v831
    %v910 = vpack.c.b16 %v836, %v834
    %v911 = vpack.c.b16 %v837, %v835
    %v912 = vpack.c.b16 %v840, %v838
    %v913 = vpack.c.b16 %v841, %v839
    %v914 = vpack.c.b16 %v844, %v842
    %v915 = vpack.c.b16 %v845, %v843
    %v916 = vpack.c.b16 %v848, %v846
    %v917 = vpack.c.b16 %v849, %v847
    %v918 = vpack.c.b16 %v852, %v850
    %v919 = vpack.c.b16 %v853, %v851
    %v920 = vpack.c.b16 %v856, %v854
    %v921 = vpack.c.b16 %v857, %v855
    %986 = vmatprep.subr.bf16.mxu0 %v859
    %987 = vmatpush1.bf16.msra.mxu0 %v858
    %988 = vmatprep.subr.bf16.mxu0 %v861
    %989 = vmatpush1.bf16.msra.mxu0 %v860
    %990 = vmatprep.subr.bf16.mxu0 %v863
    %991 = vmatpush1.bf16.msra.mxu0 %v862
    %992 = vmatprep.subr.bf16.mxu0 %v865
    %993 = vmatpush1.bf16.msra.mxu0 %v864
    %994 = vmatprep.subr.bf16.mxu0 %v867
    %995 = vmatpush1.bf16.msra.mxu0 %v866
    %996 = vmatprep.subr.bf16.mxu0 %v869
    %997 = vmatpush1.bf16.msra.mxu0 %v868
    %998 = vmatprep.subr.bf16.mxu0 %v871
    %999 = vmatpush1.bf16.msra.mxu0 %v870
    %1000 = vmatprep.subr.bf16.mxu0 %v873
    %1001 = vmatpush1.bf16.msra.mxu0 %v872
    %1002 = vmatprep.subr.bf16.mxu0 %v875
    %1003 = vmatpush1.bf16.msra.mxu0 %v874
    %1004 = vmatprep.subr.bf16.mxu0 %v877
    %1005 = vmatpush1.bf16.msra.mxu0 %v876
    %1006 = vmatprep.subr.bf16.mxu0 %v879
    %1007 = vmatpush1.bf16.msra.mxu0 %v878
    %1008 = vmatprep.subr.bf16.mxu0 %v881
    %1009 = vmatpush1.bf16.msra.mxu0 %v880
    %1010 = vmatprep.subr.bf16.mxu0 %v883
    %1011 = vmatpush1.bf16.msra.mxu0 %v882
    %1012 = vmatprep.subr.bf16.mxu0 %v885
    %1013 = vmatpush1.bf16.msra.mxu0 %v884
    %1014 = vmatprep.subr.bf16.mxu0 %v887
    %1015 = vmatpush1.bf16.msra.mxu0 %v886
    %1016 = vmatprep.subr.bf16.mxu0 %v889
    %1017 = vmatpush1.bf16.msra.mxu0 %v888
    %1018 = vmatprep.mubr.bf16.mxu0 %v587
    %1019 = vmatmul.mubr.bf16.gmra.mrb[0].mxu0 %v586
    %v1020 = vpop.f32.mrb[0].mxu0
    %v1021 = vadd.f32 %v659, %v1020
    %v1022 = vpop.f32.mrb[0].mxu0
    %v1023 = vadd.f32 %v663, %v1022
    %v1024 = vpop.f32.mrb[0].mxu0
    %v1025 = vpop.f32.mrb[0].mxu0
    %1026 = vdwg.mxu0
    %1027 = vmatprep.subr.bf16.mxu0 %v891
    %1028 = vmatpush1.bf16.msra.mxu0 %v890
    %1029 = vmatprep.subr.bf16.mxu0 %v893
    %1030 = vmatpush1.bf16.msra.mxu0 %v892
    %1031 = vmatprep.subr.bf16.mxu0 %v895
    %1032 = vmatpush1.bf16.msra.mxu0 %v894
    %1033 = vmatprep.subr.bf16.mxu0 %v897
    %1034 = vmatpush1.bf16.msra.mxu0 %v896
    %1035 = vmatprep.subr.bf16.mxu0 %v899
    %1036 = vmatpush1.bf16.msra.mxu0 %v898
    %1037 = vmatprep.subr.bf16.mxu0 %v901
    %1038 = vmatpush1.bf16.msra.mxu0 %v900
    %1039 = vmatprep.subr.bf16.mxu0 %v903
    %1040 = vmatpush1.bf16.msra.mxu0 %v902
    %1041 = vmatprep.subr.bf16.mxu0 %v905
    %1042 = vmatpush1.bf16.msra.mxu0 %v904
    %1043 = vmatprep.subr.bf16.mxu0 %v907
    %1044 = vmatpush1.bf16.msra.mxu0 %v906
    %1045 = vmatprep.subr.bf16.mxu0 %v909
    %1046 = vmatpush1.bf16.msra.mxu0 %v908
    %1047 = vmatprep.subr.bf16.mxu0 %v911
    %1048 = vmatpush1.bf16.msra.mxu0 %v910
    %1049 = vmatprep.subr.bf16.mxu0 %v913
    %1050 = vmatpush1.bf16.msra.mxu0 %v912
    %1051 = vmatprep.subr.bf16.mxu0 %v915
    %1052 = vmatpush1.bf16.msra.mxu0 %v914
    %1053 = vmatprep.subr.bf16.mxu0 %v917
    %1054 = vmatpush1.bf16.msra.mxu0 %v916
    %1055 = vmatprep.subr.bf16.mxu0 %v919
    %1056 = vmatpush1.bf16.msra.mxu0 %v918
    %1057 = vmatprep.subr.bf16.mxu0 %v921
    %1058 = vmatpush1.bf16.msra.mxu0 %v920
    %1059 = vmatprep.mubr.bf16.mxu0 %v589
    %1060 = vmatmul.mubr.bf16.gmra.mrb[0].mxu0 %v588
    %v1061 = vpop.f32.mrb[0].mxu0
    %v1062 = vadd.f32 %v1021, %v1061
    %v1063 = vpop.f32.mrb[0].mxu0
    %v1064 = vadd.f32 %v1023, %v1063
    %v1065 = vpop.f32.mrb[0].mxu0
    %v1066 = vpop.f32.mrb[0].mxu0
    %1067 = vdwg.mxu0
    %v1070 = vcombine.low %v1062, %v1064
    %v1072 = vunpack.c.l.s4 1983009808
    %v1073 = vunpack.c.0.s8 %v1072
    %v1074 = vlaneseq
    %v1075 = vshrl.u32 %v1074, 7
    %v1076 = vsub.s32 %v1073, %v1075
    %v1077 = vrot.slane %v1070, %v1076
    %1079 = vst [vmem:[#allocation8] sm:$0xf] %v1077
    // Predicated region
    $region34: #{tpu_custom_call.1} parent=1 // pred_check
      _
    $region35: #{tpu_custom_call.1} parent=1 // pred_check_branch
      %1081 = sbr.rel (0) target = $region37
    $region36: #{tpu_custom_call.1} parent=1 // pred_region
      %s1083 = ssub.s32 64, 64
      %1084 = vsyncadd [#allocation4], %s1083
      %s1086 = sshll.u32 [#allocation8], 4
      %s1087 = int_to_ptr.vmem [resolvable:$true] %s1086
      %1089 = dma.vmem_to_hbm [thread:$0]  %s1087, 64, %s5, [#allocation4]
    $region37: #{tpu_custom_call.1} parent=1 // pred_fallthru
      _
    // Predicated region
    $region38: #{tpu_custom_call.1} parent=1 // pred_check
      _
    $region39: #{tpu_custom_call.1} parent=1 // pred_check_branch
      %1091 = sbr.rel (0) target = $region41
    $region40: #{tpu_custom_call.1} parent=1 // pred_region
      %1092 = dma.done [#allocation4], 64
    $region41: #{tpu_custom_call.1} parent=1 // pred_fallthru
      _
    %1093 = vsyncpa [#allocation3], 1
    %1094 = vsyncpa [#allocation6], 1
    %1095 = vsyncpa [#allocation4], 1

</llo_original>
